<compile_context>
chip_gen: v7x
topology: tpu7x:2x2x1
jax: 0.10.0
libtpu: 0.0.40
codegen_flags: <defaults>
</compile_context>

<pallas_src>
import jax
import jax.numpy as jnp
from jax.experimental import pallas as pl
from jax.experimental.pallas import tpu as pltpu

FEAT_D = 32
BATCH = 8

_VMEM = pltpu.MemorySpace.VMEM


# ------------------------------- Pallas kernel -------------------------------

def snr_embedding_kernel(snr_ref, wb_ref, o_ref):
    """out = snr * W^T + b  (Linear with in_features == 1).

    snr_ref: (B, 1)  -- snr_db.unsqueeze(1)
    wb_ref : (2, D)  -- row 0: weight (torch (D,1) transposed), row 1: bias
    o_ref  : (B, D)
    """
    w = wb_ref[0:1, :]   # (1, D) static view, zero-cost slice
    b = wb_ref[1:2, :]   # (1, D)
    # Lane-broadcast multiply-add on the VPU; single (B, D) block store
    # (lane-masked vst.msk since D < 128 — cheap at this size).
    o_ref[...] = snr_ref[...] * w + b


# --------------------------------- wrapper -----------------------------------

def snr_embedding(snr_db, wb):
    """snr_db: (B,) float32; wb: (2, D) packed [weight; bias] -> (B, D)."""
    n = snr_db.shape[0]
    d = wb.shape[-1]
    cost = pl.CostEstimate(
        flops=2 * n * d,                          # one mul + one add per element
        transcendentals=0,
        bytes_accessed=(n + 2 * d + n * d) * 4,   # snr + wb + out, f32
    )
    return pl.pallas_call(
        snr_embedding_kernel,
        out_shape=jax.ShapeDtypeStruct((n, d), jnp.float32),
        in_specs=[pl.BlockSpec(memory_space=_VMEM),
                  pl.BlockSpec(memory_space=_VMEM)],
        out_specs=pl.BlockSpec(memory_space=_VMEM),
        cost_estimate=cost,
    )(snr_db.reshape(n, 1), wb)


# ------------------------- deterministic parameters --------------------------

def init_params(key):
    kw, kb = jax.random.split(key, 2)
    # torch nn.Linear(1, feat_d): weight (feat_d, 1), bias (feat_d,),
    # both initialized U(-sqrt(1/in_features), sqrt(1/in_features)) = U(-1, 1).
    w_torch = jax.random.uniform(kw, (FEAT_D, 1), jnp.float32, -1.0, 1.0)
    b_torch = jax.random.uniform(kb, (FEAT_D,), jnp.float32, -1.0, 1.0)
    # Packed kernel layout: (2, D) -> row 0 weight (transposed), row 1 bias.
    wb = jnp.concatenate(
        [w_torch.T.reshape(1, FEAT_D), b_torch.reshape(1, FEAT_D)], axis=0)
    return {"wb": wb}                              # (2, D)


# ----------------------------------- main -------------------------------------

if __name__ == "__main__":
    key = jax.random.PRNGKey(0)
    kp, kx = jax.random.split(key, 2)
    params = init_params(kp)

    snr_db = jax.random.normal(kx, (BATCH,), jnp.float32) * 10.0   # (B,)

    fwd = jax.jit(snr_embedding)
    out = jax.block_until_ready(fwd(snr_db, params["wb"]))

    # pure-JAX reference: Linear(1, feat_d) applied to snr_db.unsqueeze(1)
    ref = snr_db[:, None] * params["wb"][0:1, :] + params["wb"][1:2, :]

    assert out.shape == (BATCH, FEAT_D), out.shape
    assert bool(jnp.all(jnp.isfinite(out)))
    assert bool(jnp.allclose(out, ref, atol=1e-5, rtol=1e-5))
    print("KERNEL_OK")
</pallas_src>

<mosaic_0001>
module attributes {stable_mosaic.version = 11 : i64} {
  func.func @snr_embedding_kernel(%arg0: memref<8x1xf32, #tpu.memory_space<vmem>>, %arg1: memref<2x32xf32, #tpu.memory_space<vmem>>, %arg2: memref<8x32xf32, #tpu.memory_space<vmem>>) attributes {dimension_semantics = [], scalar_prefetch = 0 : i64, scratch_operands = 0 : i64, tpu.core_type = #tpu.core_type<tc>} {
    %c0 = arith.constant 0 : index
    %c0_0 = arith.constant 0 : index
    %0 = vector.load %arg1[%c0, %c0_0] : memref<2x32xf32, #tpu.memory_space<vmem>>, vector<1x32xf32>
    %c1 = arith.constant 1 : index
    %c0_1 = arith.constant 0 : index
    %1 = vector.load %arg1[%c1, %c0_1] : memref<2x32xf32, #tpu.memory_space<vmem>>, vector<1x32xf32>
    %c0_2 = arith.constant 0 : index
    %c0_3 = arith.constant 0 : index
    %2 = vector.load %arg0[%c0_2, %c0_3] : memref<8x1xf32, #tpu.memory_space<vmem>>, vector<8x1xf32>
    %3 = vector.broadcast %2 : vector<8x1xf32> to vector<8x32xf32>
    %4 = vector.broadcast %0 : vector<1x32xf32> to vector<8x32xf32>
    %5 = arith.mulf %3, %4 : vector<8x32xf32>
    %6 = vector.broadcast %1 : vector<1x32xf32> to vector<8x32xf32>
    %7 = arith.addf %5, %6 : vector<8x32xf32>
    %c0_4 = arith.constant 0 : index
    %c0_5 = arith.constant 0 : index
    %8 = vector.load %arg2[%c0_4, %c0_5] : memref<8x32xf32, #tpu.memory_space<vmem>>, vector<8x32xf32>
    tpu.vector_store %arg2[%c0_4, %c0_5], %7 {strides = array<i32>} : memref<8x32xf32, #tpu.memory_space<vmem>>, vector<8x32xf32>,
    return
  }
}

</mosaic_0001>

<llo_original>
// kernel: snr_embedding.1
$region0: #{snr_embedding.1}
  #allocation0 [shape = 'u32[]', space=smem, size = 0x4, offset = 0x4, fixed_abs, tag = 'smem constant byte address 0x4 - core index']
  #allocation1 [shape = 'u32[144,128]{1,0:T(1,128)}', space=vmem, size = 0x12000, scoped, tag = 'internal scratch']
  %s0 = inlined_call_operand.vmem [shape: f32[8,1], index: 0, kind: input, shape index: {}]
  %s1 = inlined_call_operand.vmem [shape: f32[2,32], index: 1, kind: input, shape index: {}]
  %s2 = inlined_call_operand.hbm [shape: f32[8,32], index: 2, kind: output, shape index: {}]
  %s3 = sld [smem:[#allocation0]]
  $region18: #{snr_embedding.1} parent=0
    _
  %s5 = ssub.s32 1, %s3
  %s6 = scalar_select 0, %s5, %s3
  $region1: #{snr_embedding.1} parent=0
    #allocation2 [shape = 'u8[4096]{0}', space=vmem, size = 0x1000, scoped, tag = 'output window, operand 0, single buffered']
    #allocation3 [shape = 's32[1]{0}', space=sflag, size = 0x4, scoped, tag = 'scoped memory for snr_embedding.1']
    %7 = vsyncpa [#allocation3], 0
    // Predicated region
    $region2: #{snr_embedding.1} parent=1 // pred_check
      _
    $region3: #{snr_embedding.1} parent=1 // pred_check_branch
      %9 = sbr.rel (0) target = $region5
    $region4: #{snr_embedding.1} parent=1 // pred_region
      _
    $region5: #{snr_embedding.1} parent=1 // pred_fallthru
      _
    // Predicated region
    $region6: #{snr_embedding.1} parent=1 // pred_check
      _
    $region7: #{snr_embedding.1} parent=1 // pred_check_branch
      %11 = sbr.rel (0) target = $region9
    $region8: #{snr_embedding.1} parent=1 // pred_region
      _
    $region9: #{snr_embedding.1} parent=1 // pred_fallthru
      _
    %v12 = vld [vmem:[%s1] sm:$0x1]
    %v13 = vld [vmem:[%s1 + $0x1] sm:$0x1]
    %v14 = vld [vmem:[%s0] sm:$0xff]
    %16 = vset.pattern.permute.xlu0 0
    %17 = vperm.xlu0 %16, %v14
    %v18 = vpop.permute.xlu0 %17
    %v20 = vlaneseq
    %v21 = vshrl.u32 %v20, 7
    %v22 = vsub.s32 0, %v21
    %v23 = vrot.slane %v12, %v22
    %v24 = vmul.f32 %v18, %v23
    %v25 = vlaneseq
    %v26 = vshrl.u32 %v25, 7
    %v27 = vsub.s32 0, %v26
    %v28 = vrot.slane %v13, %v27
    %v29 = vadd.f32 %v24, %v28
    %vm30 = vcmask 261120
    %31 = vst.msk [vmem:[#allocation2] sm:$0xff] %vm30, %v29
    // Predicated region
    $region10: #{snr_embedding.1} parent=1 // pred_check
      _
    $region11: #{snr_embedding.1} parent=1 // pred_check_branch
      %33 = sbr.rel (0) target = $region13
    $region12: #{snr_embedding.1} parent=1 // pred_region
      %s35 = ssub.s32 128, 128
      %36 = vsyncadd [#allocation3], %s35
      %s38 = sshll.u32 [#allocation2], 4
      %s39 = int_to_ptr.vmem [resolvable:$true] %s38
      %41 = dma.vmem_to_hbm [thread:$0]  %s39, 128, %s2, [#allocation3]
    $region13: #{snr_embedding.1} parent=1 // pred_fallthru
      _
    // Predicated region
    $region14: #{snr_embedding.1} parent=1 // pred_check
      _
    $region15: #{snr_embedding.1} parent=1 // pred_check_branch
      %43 = sbr.rel (0) target = $region17
    $region16: #{snr_embedding.1} parent=1 // pred_region
      %44 = dma.done [#allocation3], 128
    $region17: #{snr_embedding.1} parent=1 // pred_fallthru
      _
    %45 = vsyncpa [#allocation3], 1

</llo_original>
